<compile_context>
chip_gen: v5e
topology: v5e:2x2
jax: 0.10.0
libtpu: 0.0.40
codegen_flags: <defaults>
</compile_context>

<pallas_src>
import jax
import jax.numpy as jnp
from jax import lax
from jax.experimental import pallas as pl
from jax.experimental.pallas import tpu as pltpu

SUBL = 8                       # f32 sublane count
_CHUNK_ELEMS = 16 * 1024       # ~16 f32 vregs per register-resident chunk
_BLOCK_BYTES = 2 * 1024 * 1024 # ~2 MiB f32 per grid block (in+out dbl-buffered ~8 MiB)
_MIN_BLOCK_ELEMS = 64 * 1024   # don't shatter large inputs into tiny blocks
_SMALL_ELEMS = 64 * 1024       # below this a single block is best


def _fp6_relu_kernel(mids_ref, rvals_ref, x_ref, o_ref):
    """Nearest-value quantization (sorted table) fused with ReLU.

    mids_ref:  SMEM (n_vals-1,) f32 -- bin midpoints of the sorted table
    rvals_ref: SMEM (n_vals,)   f32 -- relu(sorted table)
    x_ref:     VMEM (block_r, cols)     -- input tile
    o_ref:     VMEM (block_r, cols) f32 -- output tile
    """
    block_r, cols = x_ref.shape
    n_vals = rvals_ref.shape[0]

    # Row-chunk size: ~16 f32 vregs so y/out stay register-resident through the
    # unrolled select chain.
    ch = max(1, _CHUNK_ELEMS // cols)
    if ch >= SUBL:
        ch = (ch // SUBL) * SUBL
    ch = min(ch, block_r)
    n_full = block_r // ch
    rem = block_r - n_full * ch

    def quantize(y):
        if y.dtype != jnp.float32:
            y = y.astype(jnp.float32)
        # Midpoint select chain: out = relu(vals[j]) for the bin containing y;
        # ties go to the lower value (strict y > mid), matching the reference's
        # dist_low <= dist_high test.  ReLU is folded into rvals.
        out = jnp.where(y > mids_ref[0], rvals_ref[1], rvals_ref[0])
        for j in range(2, n_vals):
            out = jnp.where(y > mids_ref[j - 1], rvals_ref[j], out)
        return out

    if n_full == 1 and rem == 0:
        # Whole block is a single chunk.
        o_ref[...] = quantize(x_ref[...])
        return

    def body(c, carry):
        r0 = pl.multiple_of(c * ch, ch)
        o_ref[pl.ds(r0, ch), :] = quantize(x_ref[pl.ds(r0, ch), :])
        return carry

    lax.fori_loop(0, n_full, body, 0)

    if rem:  # static tail when block rows are not a multiple of the chunk
        r0 = n_full * ch
        o_ref[pl.ds(r0, rem), :] = quantize(x_ref[pl.ds(r0, rem), :])


def _select_tiling(n):
    """Pick a lane-dense (rows, cols) slab, per-grid-step row count, and pad.

    Preference order:
      1. A width (multiple of 128) dividing n exactly -> zero-copy reshape,
         no pad/slice HBM passes.
      2. For large inputs, a block_r that is a multiple of 8, divides rows,
         stays under ~2 MiB, isn't absurdly small, and leaves >= 2 grid steps
         (keeps both v7x TensorCores busy, overlaps DMA with compute).
      3. Otherwise a single full-array block, or (rare) a padded slab.
    """
    small = n <= _SMALL_ELEMS
    exact_cols = [c for c in (2048, 1024, 512, 256, 128) if n % c == 0]

    if exact_cols:
        if small:
            c = exact_cols[0]
            return n // c, c, n // c, 0
        for c in exact_cols:
            rows = n // c
            if rows < 2 * SUBL:
                continue
            cap_r = max(SUBL, ((_BLOCK_BYTES // 4) // c) // SUBL * SUBL)
            hi = min(cap_r, (rows // 2) // SUBL * SUBL)
            floor_r = max(SUBL, min(hi, (_MIN_BLOCK_ELEMS // c) // SUBL * SUBL))
            for br in range(hi, floor_r - 1, -SUBL):
                if rows % br == 0:
                    return rows, c, br, 0
        # No clean multi-block split; a single block is fine if modest.
        c = exact_cols[0]
        rows = n // c
        if rows * c * 4 <= 4 * _BLOCK_BYTES:
            return rows, c, rows, 0

    # Fallback: pad to a (rows, 1024) slab.
    # TODO(synk): the ragged tail could be masked in-kernel (scalar-prefetched n)
    # to avoid the pad/slice HBM passes; rare for real activation shapes.
    cols = 1024
    rows_needed = -(-n // cols)
    if small:
        return rows_needed, cols, rows_needed, rows_needed * cols - n
    cap_r = max(SUBL, ((_BLOCK_BYTES // 4) // cols) // SUBL * SUBL)
    block_r = min(cap_r, max(SUBL, (-(-rows_needed // 2) // SUBL) * SUBL))
    rows = -(-rows_needed // block_r) * block_r
    return rows, cols, block_r, rows * cols - n


def fp6_relu(x, fp6_values):
    """Forward pass of FP6ReLU.

    x:          any-shape array (e.g. NCHW activations)
    fp6_values: shape (n_vals,) -- LearnableFP6Activation.fp6_values parameter
    """
    orig_shape = x.shape
    n = x.size
    n_vals = fp6_values.shape[0]
    assert n_vals >= 2, "quantization table needs at least 2 entries"

    # Tiny table preprocessing (outside the kernel): sort, midpoints, fused ReLU.
    sorted_vals = jnp.sort(fp6_values.astype(jnp.float32))
    lo = sorted_vals[:-1]
    hi = sorted_vals[1:]
    mids = lo + (hi - lo) * 0.5                                # (n_vals-1,) robust midpoints
    relu_vals = jnp.where(sorted_vals < 0, 0.0, sorted_vals)   # (n_vals,)

    rows, cols, block_r, pad = _select_tiling(n)

    xf = x.reshape(-1)
    if pad:
        # Pad region is quantized too (harmless; sliced off below).
        xf = jnp.pad(xf, (0, pad))
    xf = xf.reshape(rows, cols)

    grid = (rows // block_r,)

    out = pl.pallas_call(
        _fp6_relu_kernel,
        out_shape=jax.ShapeDtypeStruct((rows, cols), jnp.float32),
        grid=grid,
        in_specs=[
            pl.BlockSpec(memory_space=pltpu.MemorySpace.SMEM),   # midpoints (n_vals-1,)
            pl.BlockSpec(memory_space=pltpu.MemorySpace.SMEM),   # relu(table) (n_vals,)
            pl.BlockSpec((block_r, cols), lambda i: (i, 0)),     # x tile
        ],
        out_specs=pl.BlockSpec((block_r, cols), lambda i: (i, 0)),
        compiler_params=pltpu.CompilerParams(
            dimension_semantics=("parallel",)),
    )(mids, relu_vals, xf)

    out_flat = out.reshape(-1)
    if pad:
        out_flat = out_flat[:n]
    # Output dtype is f32 (the table's dtype), matching the torch module.
    return out_flat.reshape(orig_shape)


def _ref_fp6_relu(x, fp6_values):
    """Pure-JAX reference mirroring the PyTorch module exactly."""
    vals = jnp.sort(fp6_values.astype(jnp.float32))
    y = x.astype(jnp.float32)
    idx = jnp.searchsorted(vals, y, side="left")
    idx = jnp.clip(idx, 1, vals.shape[0] - 1)
    high = vals[idx]
    low = vals[idx - 1]
    q = jnp.where(jnp.abs(y - low) <= jnp.abs(y - high), low, high)
    return jnp.where(q < 0, 0.0, q)


if __name__ == "__main__":
    # Deterministic parameter init, matching LearnableFP6Activation.__init__.
    init_vals = [0.0, 0.0625, 0.125, 0.1875, 0.25, 0.3125, 0.375, 0.4375, 0.5,
                 0.625, 0.75, 0.875, 1.0, 1.25, 1.5, 1.75, 2.0, 2.5, 3.0, 3.5,
                 4.0, 5.0, 6.0, 7.0, 8.0, 10.0, 12.0, 14.0, 16.0, 20.0, 24.0,
                 28.0, -0.0625, -0.125, -0.1875, -0.25, -0.3125, -0.375,
                 -0.4375, -0.5, -0.625, -0.75, -0.875, -1.0, -1.25, -1.5,
                 -1.75, -2.0, -2.5, -3.0, -3.5, -4.0, -5.0, -6.0, -7.0, -8.0,
                 -10.0, -12.0, -14.0, -16.0, -20.0, -24.0, -28.0, -32.0]
    fp6_values = jnp.asarray(sorted(set(init_vals))[:64], dtype=jnp.float32)

    key = jax.random.PRNGKey(0)
    k1, k2, k3 = jax.random.split(key, 3)

    # Small NCHW input, scaled to exercise many quantization bins (incl. negatives).
    x = jax.random.normal(k1, (2, 4, 16, 16), dtype=jnp.float32) * 6.0
    out = jax.block_until_ready(fp6_relu(x, fp6_values))
    ref = _ref_fp6_relu(x, fp6_values)
    assert out.shape == x.shape
    assert jnp.allclose(out, ref, atol=1e-6), "mismatch vs pure-JAX reference (main)"
    assert bool(jnp.all(out >= 0.0)), "ReLU not applied"

    # Exercise the multi-block (grid >= 2) path.
    x2 = jax.random.normal(k2, (2, 16, 64, 64), dtype=jnp.float32) * 6.0
    out2 = jax.block_until_ready(fp6_relu(x2, fp6_values))
    assert jnp.allclose(out2, _ref_fp6_relu(x2, fp6_values), atol=1e-6), \
        "mismatch vs pure-JAX reference (gridded)"

    # Exercise the ragged-tail fallback (element count not a multiple of 128).
    x3 = jax.random.normal(k3, (3, 5, 7, 11), dtype=jnp.float32) * 6.0
    out3 = jax.block_until_ready(fp6_relu(x3, fp6_values))
    assert out3.shape == x3.shape
    assert jnp.allclose(out3, _ref_fp6_relu(x3, fp6_values), atol=1e-6), \
        "mismatch vs pure-JAX reference (ragged)"

    print("KERNEL_OK")
</pallas_src>

<mosaic_0001>
module attributes {stable_mosaic.version = 11 : i64} {
  func.func @_fp6_relu_kernel(%arg0: i32, %arg1: memref<63xf32, #tpu.memory_space<smem>>, %arg2: memref<64xf32, #tpu.memory_space<smem>>, %arg3: memref<1x2048xf32, #tpu.memory_space<vmem>>, %arg4: memref<1x2048xf32, #tpu.memory_space<vmem>>) attributes {dimension_semantics = [#tpu.dimension_semantics<parallel>], iteration_bounds = array<i64: 1>, scalar_prefetch = 0 : i64, scratch_operands = 0 : i64, tpu.core_type = #tpu.core_type<tc>, window_params = [{transform_indices = @transform_0, window_bounds = array<i64: 63>}, {transform_indices = @transform_1, window_bounds = array<i64: 64>}, {transform_indices = @transform_2, window_bounds = array<i64: 1, 2048>}, {transform_indices = @transform_3, window_bounds = array<i64: 1, 2048>}]} {
    %c0 = arith.constant 0 : index
    %c0_0 = arith.constant 0 : index
    %0 = vector.load %arg3[%c0, %c0_0] : memref<1x2048xf32, #tpu.memory_space<vmem>>, vector<1x2048xf32>
    %c0_1 = arith.constant 0 : index
    %1 = memref.load %arg1[%c0_1] : memref<63xf32, #tpu.memory_space<smem>>
    %2 = vector.broadcast %1 : f32 to vector<1x2048xf32>
    %3 = arith.cmpf ogt, %0, %2 : vector<1x2048xf32>
    %c1 = arith.constant 1 : index
    %4 = memref.load %arg2[%c1] : memref<64xf32, #tpu.memory_space<smem>>
    %c0_2 = arith.constant 0 : index
    %5 = memref.load %arg2[%c0_2] : memref<64xf32, #tpu.memory_space<smem>>
    %6 = vector.broadcast %4 : f32 to vector<1x2048xf32>
    %7 = vector.broadcast %5 : f32 to vector<1x2048xf32>
    %8 = arith.select %3, %6, %7 : vector<1x2048xi1>, vector<1x2048xf32>
    %c1_3 = arith.constant 1 : index
    %9 = memref.load %arg1[%c1_3] : memref<63xf32, #tpu.memory_space<smem>>
    %10 = vector.broadcast %9 : f32 to vector<1x2048xf32>
    %11 = arith.cmpf ogt, %0, %10 : vector<1x2048xf32>
    %c2 = arith.constant 2 : index
    %12 = memref.load %arg2[%c2] : memref<64xf32, #tpu.memory_space<smem>>
    %13 = vector.broadcast %12 : f32 to vector<1x2048xf32>
    %14 = arith.select %11, %13, %8 : vector<1x2048xi1>, vector<1x2048xf32>
    %c2_4 = arith.constant 2 : index
    %15 = memref.load %arg1[%c2_4] : memref<63xf32, #tpu.memory_space<smem>>
    %16 = vector.broadcast %15 : f32 to vector<1x2048xf32>
    %17 = arith.cmpf ogt, %0, %16 : vector<1x2048xf32>
    %c3 = arith.constant 3 : index
    %18 = memref.load %arg2[%c3] : memref<64xf32, #tpu.memory_space<smem>>
    %19 = vector.broadcast %18 : f32 to vector<1x2048xf32>
    %20 = arith.select %17, %19, %14 : vector<1x2048xi1>, vector<1x2048xf32>
    %c3_5 = arith.constant 3 : index
    %21 = memref.load %arg1[%c3_5] : memref<63xf32, #tpu.memory_space<smem>>
    %22 = vector.broadcast %21 : f32 to vector<1x2048xf32>
    %23 = arith.cmpf ogt, %0, %22 : vector<1x2048xf32>
    %c4 = arith.constant 4 : index
    %24 = memref.load %arg2[%c4] : memref<64xf32, #tpu.memory_space<smem>>
    %25 = vector.broadcast %24 : f32 to vector<1x2048xf32>
    %26 = arith.select %23, %25, %20 : vector<1x2048xi1>, vector<1x2048xf32>
    %c4_6 = arith.constant 4 : index
    %27 = memref.load %arg1[%c4_6] : memref<63xf32, #tpu.memory_space<smem>>
    %28 = vector.broadcast %27 : f32 to vector<1x2048xf32>
    %29 = arith.cmpf ogt, %0, %28 : vector<1x2048xf32>
    %c5 = arith.constant 5 : index
    %30 = memref.load %arg2[%c5] : memref<64xf32, #tpu.memory_space<smem>>
    %31 = vector.broadcast %30 : f32 to vector<1x2048xf32>
    %32 = arith.select %29, %31, %26 : vector<1x2048xi1>, vector<1x2048xf32>
    %c5_7 = arith.constant 5 : index
    %33 = memref.load %arg1[%c5_7] : memref<63xf32, #tpu.memory_space<smem>>
    %34 = vector.broadcast %33 : f32 to vector<1x2048xf32>
    %35 = arith.cmpf ogt, %0, %34 : vector<1x2048xf32>
    %c6 = arith.constant 6 : index
    %36 = memref.load %arg2[%c6] : memref<64xf32, #tpu.memory_space<smem>>
    %37 = vector.broadcast %36 : f32 to vector<1x2048xf32>
    %38 = arith.select %35, %37, %32 : vector<1x2048xi1>, vector<1x2048xf32>
    %c6_8 = arith.constant 6 : index
    %39 = memref.load %arg1[%c6_8] : memref<63xf32, #tpu.memory_space<smem>>
    %40 = vector.broadcast %39 : f32 to vector<1x2048xf32>
    %41 = arith.cmpf ogt, %0, %40 : vector<1x2048xf32>
    %c7 = arith.constant 7 : index
    %42 = memref.load %arg2[%c7] : memref<64xf32, #tpu.memory_space<smem>>
    %43 = vector.broadcast %42 : f32 to vector<1x2048xf32>
    %44 = arith.select %41, %43, %38 : vector<1x2048xi1>, vector<1x2048xf32>
    %c7_9 = arith.constant 7 : index
    %45 = memref.load %arg1[%c7_9] : memref<63xf32, #tpu.memory_space<smem>>
    %46 = vector.broadcast %45 : f32 to vector<1x2048xf32>
    %47 = arith.cmpf ogt, %0, %46 : vector<1x2048xf32>
    %c8 = arith.constant 8 : index
    %48 = memref.load %arg2[%c8] : memref<64xf32, #tpu.memory_space<smem>>
    %49 = vector.broadcast %48 : f32 to vector<1x2048xf32>
    %50 = arith.select %47, %49, %44 : vector<1x2048xi1>, vector<1x2048xf32>
    %c8_10 = arith.constant 8 : index
    %51 = memref.load %arg1[%c8_10] : memref<63xf32, #tpu.memory_space<smem>>
    %52 = vector.broadcast %51 : f32 to vector<1x2048xf32>
    %53 = arith.cmpf ogt, %0, %52 : vector<1x2048xf32>
    %c9 = arith.constant 9 : index
    %54 = memref.load %arg2[%c9] : memref<64xf32, #tpu.memory_space<smem>>
    %55 = vector.broadcast %54 : f32 to vector<1x2048xf32>
    %56 = arith.select %53, %55, %50 : vector<1x2048xi1>, vector<1x2048xf32>
    %c9_11 = arith.constant 9 : index
    %57 = memref.load %arg1[%c9_11] : memref<63xf32, #tpu.memory_space<smem>>
    %58 = vector.broadcast %57 : f32 to vector<1x2048xf32>
    %59 = arith.cmpf ogt, %0, %58 : vector<1x2048xf32>
    %c10 = arith.constant 10 : index
    %60 = memref.load %arg2[%c10] : memref<64xf32, #tpu.memory_space<smem>>
    %61 = vector.broadcast %60 : f32 to vector<1x2048xf32>
    %62 = arith.select %59, %61, %56 : vector<1x2048xi1>, vector<1x2048xf32>
    %c10_12 = arith.constant 10 : index
    %63 = memref.load %arg1[%c10_12] : memref<63xf32, #tpu.memory_space<smem>>
    %64 = vector.broadcast %63 : f32 to vector<1x2048xf32>
    %65 = arith.cmpf ogt, %0, %64 : vector<1x2048xf32>
    %c11 = arith.constant 11 : index
    %66 = memref.load %arg2[%c11] : memref<64xf32, #tpu.memory_space<smem>>
    %67 = vector.broadcast %66 : f32 to vector<1x2048xf32>
    %68 = arith.select %65, %67, %62 : vector<1x2048xi1>, vector<1x2048xf32>
    %c11_13 = arith.constant 11 : index
    %69 = memref.load %arg1[%c11_13] : memref<63xf32, #tpu.memory_space<smem>>
    %70 = vector.broadcast %69 : f32 to vector<1x2048xf32>
    %71 = arith.cmpf ogt, %0, %70 : vector<1x2048xf32>
    %c12 = arith.constant 12 : index
    %72 = memref.load %arg2[%c12] : memref<64xf32, #tpu.memory_space<smem>>
    %73 = vector.broadcast %72 : f32 to vector<1x2048xf32>
    %74 = arith.select %71, %73, %68 : vector<1x2048xi1>, vector<1x2048xf32>
    %c12_14 = arith.constant 12 : index
    %75 = memref.load %arg1[%c12_14] : memref<63xf32, #tpu.memory_space<smem>>
    %76 = vector.broadcast %75 : f32 to vector<1x2048xf32>
    %77 = arith.cmpf ogt, %0, %76 : vector<1x2048xf32>
    %c13 = arith.constant 13 : index
    %78 = memref.load %arg2[%c13] : memref<64xf32, #tpu.memory_space<smem>>
    %79 = vector.broadcast %78 : f32 to vector<1x2048xf32>
    %80 = arith.select %77, %79, %74 : vector<1x2048xi1>, vector<1x2048xf32>
    %c13_15 = arith.constant 13 : index
    %81 = memref.load %arg1[%c13_15] : memref<63xf32, #tpu.memory_space<smem>>
    %82 = vector.broadcast %81 : f32 to vector<1x2048xf32>
    %83 = arith.cmpf ogt, %0, %82 : vector<1x2048xf32>
    %c14 = arith.constant 14 : index
    %84 = memref.load %arg2[%c14] : memref<64xf32, #tpu.memory_space<smem>>
    %85 = vector.broadcast %84 : f32 to vector<1x2048xf32>
    %86 = arith.select %83, %85, %80 : vector<1x2048xi1>, vector<1x2048xf32>
    %c14_16 = arith.constant 14 : index
    %87 = memref.load %arg1[%c14_16] : memref<63xf32, #tpu.memory_space<smem>>
    %88 = vector.broadcast %87 : f32 to vector<1x2048xf32>
    %89 = arith.cmpf ogt, %0, %88 : vector<1x2048xf32>
    %c15 = arith.constant 15 : index
    %90 = memref.load %arg2[%c15] : memref<64xf32, #tpu.memory_space<smem>>
    %91 = vector.broadcast %90 : f32 to vector<1x2048xf32>
    %92 = arith.select %89, %91, %86 : vector<1x2048xi1>, vector<1x2048xf32>
    %c15_17 = arith.constant 15 : index
    %93 = memref.load %arg1[%c15_17] : memref<63xf32, #tpu.memory_space<smem>>
    %94 = vector.broadcast %93 : f32 to vector<1x2048xf32>
    %95 = arith.cmpf ogt, %0, %94 : vector<1x2048xf32>
    %c16 = arith.constant 16 : index
    %96 = memref.load %arg2[%c16] : memref<64xf32, #tpu.memory_space<smem>>
    %97 = vector.broadcast %96 : f32 to vector<1x2048xf32>
    %98 = arith.select %95, %97, %92 : vector<1x2048xi1>, vector<1x2048xf32>
    %c16_18 = arith.constant 16 : index
    %99 = memref.load %arg1[%c16_18] : memref<63xf32, #tpu.memory_space<smem>>
    %100 = vector.broadcast %99 : f32 to vector<1x2048xf32>
    %101 = arith.cmpf ogt, %0, %100 : vector<1x2048xf32>
    %c17 = arith.constant 17 : index
    %102 = memref.load %arg2[%c17] : memref<64xf32, #tpu.memory_space<smem>>
    %103 = vector.broadcast %102 : f32 to vector<1x2048xf32>
    %104 = arith.select %101, %103, %98 : vector<1x2048xi1>, vector<1x2048xf32>
    %c17_19 = arith.constant 17 : index
    %105 = memref.load %arg1[%c17_19] : memref<63xf32, #tpu.memory_space<smem>>
    %106 = vector.broadcast %105 : f32 to vector<1x2048xf32>
    %107 = arith.cmpf ogt, %0, %106 : vector<1x2048xf32>
    %c18 = arith.constant 18 : index
    %108 = memref.load %arg2[%c18] : memref<64xf32, #tpu.memory_space<smem>>
    %109 = vector.broadcast %108 : f32 to vector<1x2048xf32>
    %110 = arith.select %107, %109, %104 : vector<1x2048xi1>, vector<1x2048xf32>
    %c18_20 = arith.constant 18 : index
    %111 = memref.load %arg1[%c18_20] : memref<63xf32, #tpu.memory_space<smem>>
    %112 = vector.broadcast %111 : f32 to vector<1x2048xf32>
    %113 = arith.cmpf ogt, %0, %112 : vector<1x2048xf32>
    %c19 = arith.constant 19 : index
    %114 = memref.load %arg2[%c19] : memref<64xf32, #tpu.memory_space<smem>>
    %115 = vector.broadcast %114 : f32 to vector<1x2048xf32>
    %116 = arith.select %113, %115, %110 : vector<1x2048xi1>, vector<1x2048xf32>
    %c19_21 = arith.constant 19 : index
    %117 = memref.load %arg1[%c19_21] : memref<63xf32, #tpu.memory_space<smem>>
    %118 = vector.broadcast %117 : f32 to vector<1x2048xf32>
    %119 = arith.cmpf ogt, %0, %118 : vector<1x2048xf32>
    %c20 = arith.constant 20 : index
    %120 = memref.load %arg2[%c20] : memref<64xf32, #tpu.memory_space<smem>>
    %121 = vector.broadcast %120 : f32 to vector<1x2048xf32>
    %122 = arith.select %119, %121, %116 : vector<1x2048xi1>, vector<1x2048xf32>
    %c20_22 = arith.constant 20 : index
    %123 = memref.load %arg1[%c20_22] : memref<63xf32, #tpu.memory_space<smem>>
    %124 = vector.broadcast %123 : f32 to vector<1x2048xf32>
    %125 = arith.cmpf ogt, %0, %124 : vector<1x2048xf32>
    %c21 = arith.constant 21 : index
    %126 = memref.load %arg2[%c21] : memref<64xf32, #tpu.memory_space<smem>>
    %127 = vector.broadcast %126 : f32 to vector<1x2048xf32>
    %128 = arith.select %125, %127, %122 : vector<1x2048xi1>, vector<1x2048xf32>
    %c21_23 = arith.constant 21 : index
    %129 = memref.load %arg1[%c21_23] : memref<63xf32, #tpu.memory_space<smem>>
    %130 = vector.broadcast %129 : f32 to vector<1x2048xf32>
    %131 = arith.cmpf ogt, %0, %130 : vector<1x2048xf32>
    %c22 = arith.constant 22 : index
    %132 = memref.load %arg2[%c22] : memref<64xf32, #tpu.memory_space<smem>>
    %133 = vector.broadcast %132 : f32 to vector<1x2048xf32>
    %134 = arith.select %131, %133, %128 : vector<1x2048xi1>, vector<1x2048xf32>
    %c22_24 = arith.constant 22 : index
    %135 = memref.load %arg1[%c22_24] : memref<63xf32, #tpu.memory_space<smem>>
    %136 = vector.broadcast %135 : f32 to vector<1x2048xf32>
    %137 = arith.cmpf ogt, %0, %136 : vector<1x2048xf32>
    %c23 = arith.constant 23 : index
    %138 = memref.load %arg2[%c23] : memref<64xf32, #tpu.memory_space<smem>>
    %139 = vector.broadcast %138 : f32 to vector<1x2048xf32>
    %140 = arith.select %137, %139, %134 : vector<1x2048xi1>, vector<1x2048xf32>
    %c23_25 = arith.constant 23 : index
    %141 = memref.load %arg1[%c23_25] : memref<63xf32, #tpu.memory_space<smem>>
    %142 = vector.broadcast %141 : f32 to vector<1x2048xf32>
    %143 = arith.cmpf ogt, %0, %142 : vector<1x2048xf32>
    %c24 = arith.constant 24 : index
    %144 = memref.load %arg2[%c24] : memref<64xf32, #tpu.memory_space<smem>>
    %145 = vector.broadcast %144 : f32 to vector<1x2048xf32>
    %146 = arith.select %143, %145, %140 : vector<1x2048xi1>, vector<1x2048xf32>
    %c24_26 = arith.constant 24 : index
    %147 = memref.load %arg1[%c24_26] : memref<63xf32, #tpu.memory_space<smem>>
    %148 = vector.broadcast %147 : f32 to vector<1x2048xf32>
    %149 = arith.cmpf ogt, %0, %148 : vector<1x2048xf32>
    %c25 = arith.constant 25 : index
    %150 = memref.load %arg2[%c25] : memref<64xf32, #tpu.memory_space<smem>>
    %151 = vector.broadcast %150 : f32 to vector<1x2048xf32>
    %152 = arith.select %149, %151, %146 : vector<1x2048xi1>, vector<1x2048xf32>
    %c25_27 = arith.constant 25 : index
    %153 = memref.load %arg1[%c25_27] : memref<63xf32, #tpu.memory_space<smem>>
    %154 = vector.broadcast %153 : f32 to vector<1x2048xf32>
    %155 = arith.cmpf ogt, %0, %154 : vector<1x2048xf32>
    %c26 = arith.constant 26 : index
    %156 = memref.load %arg2[%c26] : memref<64xf32, #tpu.memory_space<smem>>
    %157 = vector.broadcast %156 : f32 to vector<1x2048xf32>
    %158 = arith.select %155, %157, %152 : vector<1x2048xi1>, vector<1x2048xf32>
    %c26_28 = arith.constant 26 : index
    %159 = memref.load %arg1[%c26_28] : memref<63xf32, #tpu.memory_space<smem>>
    %160 = vector.broadcast %159 : f32 to vector<1x2048xf32>
    %161 = arith.cmpf ogt, %0, %160 : vector<1x2048xf32>
    %c27 = arith.constant 27 : index
    %162 = memref.load %arg2[%c27] : memref<64xf32, #tpu.memory_space<smem>>
    %163 = vector.broadcast %162 : f32 to vector<1x2048xf32>
    %164 = arith.select %161, %163, %158 : vector<1x2048xi1>, vector<1x2048xf32>
    %c27_29 = arith.constant 27 : index
    %165 = memref.load %arg1[%c27_29] : memref<63xf32, #tpu.memory_space<smem>>
    %166 = vector.broadcast %165 : f32 to vector<1x2048xf32>
    %167 = arith.cmpf ogt, %0, %166 : vector<1x2048xf32>
    %c28 = arith.constant 28 : index
    %168 = memref.load %arg2[%c28] : memref<64xf32, #tpu.memory_space<smem>>
    %169 = vector.broadcast %168 : f32 to vector<1x2048xf32>
    %170 = arith.select %167, %169, %164 : vector<1x2048xi1>, vector<1x2048xf32>
    %c28_30 = arith.constant 28 : index
    %171 = memref.load %arg1[%c28_30] : memref<63xf32, #tpu.memory_space<smem>>
    %172 = vector.broadcast %171 : f32 to vector<1x2048xf32>
    %173 = arith.cmpf ogt, %0, %172 : vector<1x2048xf32>
    %c29 = arith.constant 29 : index
    %174 = memref.load %arg2[%c29] : memref<64xf32, #tpu.memory_space<smem>>
    %175 = vector.broadcast %174 : f32 to vector<1x2048xf32>
    %176 = arith.select %173, %175, %170 : vector<1x2048xi1>, vector<1x2048xf32>
    %c29_31 = arith.constant 29 : index
    %177 = memref.load %arg1[%c29_31] : memref<63xf32, #tpu.memory_space<smem>>
    %178 = vector.broadcast %177 : f32 to vector<1x2048xf32>
    %179 = arith.cmpf ogt, %0, %178 : vector<1x2048xf32>
    %c30 = arith.constant 30 : index
    %180 = memref.load %arg2[%c30] : memref<64xf32, #tpu.memory_space<smem>>
    %181 = vector.broadcast %180 : f32 to vector<1x2048xf32>
    %182 = arith.select %179, %181, %176 : vector<1x2048xi1>, vector<1x2048xf32>
    %c30_32 = arith.constant 30 : index
    %183 = memref.load %arg1[%c30_32] : memref<63xf32, #tpu.memory_space<smem>>
    %184 = vector.broadcast %183 : f32 to vector<1x2048xf32>
    %185 = arith.cmpf ogt, %0, %184 : vector<1x2048xf32>
    %c31 = arith.constant 31 : index
    %186 = memref.load %arg2[%c31] : memref<64xf32, #tpu.memory_space<smem>>
    %187 = vector.broadcast %186 : f32 to vector<1x2048xf32>
    %188 = arith.select %185, %187, %182 : vector<1x2048xi1>, vector<1x2048xf32>
    %c31_33 = arith.constant 31 : index
    %189 = memref.load %arg1[%c31_33] : memref<63xf32, #tpu.memory_space<smem>>
    %190 = vector.broadcast %189 : f32 to vector<1x2048xf32>
    %191 = arith.cmpf ogt, %0, %190 : vector<1x2048xf32>
    %c32 = arith.constant 32 : index
    %192 = memref.load %arg2[%c32] : memref<64xf32, #tpu.memory_space<smem>>
    %193 = vector.broadcast %192 : f32 to vector<1x2048xf32>
    %194 = arith.select %191, %193, %188 : vector<1x2048xi1>, vector<1x2048xf32>
    %c32_34 = arith.constant 32 : index
    %195 = memref.load %arg1[%c32_34] : memref<63xf32, #tpu.memory_space<smem>>
    %196 = vector.broadcast %195 : f32 to vector<1x2048xf32>
    %197 = arith.cmpf ogt, %0, %196 : vector<1x2048xf32>
    %c33 = arith.constant 33 : index
    %198 = memref.load %arg2[%c33] : memref<64xf32, #tpu.memory_space<smem>>
    %199 = vector.broadcast %198 : f32 to vector<1x2048xf32>
    %200 = arith.select %197, %199, %194 : vector<1x2048xi1>, vector<1x2048xf32>
    %c33_35 = arith.constant 33 : index
    %201 = memref.load %arg1[%c33_35] : memref<63xf32, #tpu.memory_space<smem>>
    %202 = vector.broadcast %201 : f32 to vector<1x2048xf32>
    %203 = arith.cmpf ogt, %0, %202 : vector<1x2048xf32>
    %c34 = arith.constant 34 : index
    %204 = memref.load %arg2[%c34] : memref<64xf32, #tpu.memory_space<smem>>
    %205 = vector.broadcast %204 : f32 to vector<1x2048xf32>
    %206 = arith.select %203, %205, %200 : vector<1x2048xi1>, vector<1x2048xf32>
    %c34_36 = arith.constant 34 : index
    %207 = memref.load %arg1[%c34_36] : memref<63xf32, #tpu.memory_space<smem>>
    %208 = vector.broadcast %207 : f32 to vector<1x2048xf32>
    %209 = arith.cmpf ogt, %0, %208 : vector<1x2048xf32>
    %c35 = arith.constant 35 : index
    %210 = memref.load %arg2[%c35] : memref<64xf32, #tpu.memory_space<smem>>
    %211 = vector.broadcast %210 : f32 to vector<1x2048xf32>
    %212 = arith.select %209, %211, %206 : vector<1x2048xi1>, vector<1x2048xf32>
    %c35_37 = arith.constant 35 : index
    %213 = memref.load %arg1[%c35_37] : memref<63xf32, #tpu.memory_space<smem>>
    %214 = vector.broadcast %213 : f32 to vector<1x2048xf32>
    %215 = arith.cmpf ogt, %0, %214 : vector<1x2048xf32>
    %c36 = arith.constant 36 : index
    %216 = memref.load %arg2[%c36] : memref<64xf32, #tpu.memory_space<smem>>
    %217 = vector.broadcast %216 : f32 to vector<1x2048xf32>
    %218 = arith.select %215, %217, %212 : vector<1x2048xi1>, vector<1x2048xf32>
    %c36_38 = arith.constant 36 : index
    %219 = memref.load %arg1[%c36_38] : memref<63xf32, #tpu.memory_space<smem>>
    %220 = vector.broadcast %219 : f32 to vector<1x2048xf32>
    %221 = arith.cmpf ogt, %0, %220 : vector<1x2048xf32>
    %c37 = arith.constant 37 : index
    %222 = memref.load %arg2[%c37] : memref<64xf32, #tpu.memory_space<smem>>
    %223 = vector.broadcast %222 : f32 to vector<1x2048xf32>
    %224 = arith.select %221, %223, %218 : vector<1x2048xi1>, vector<1x2048xf32>
    %c37_39 = arith.constant 37 : index
    %225 = memref.load %arg1[%c37_39] : memref<63xf32, #tpu.memory_space<smem>>
    %226 = vector.broadcast %225 : f32 to vector<1x2048xf32>
    %227 = arith.cmpf ogt, %0, %226 : vector<1x2048xf32>
    %c38 = arith.constant 38 : index
    %228 = memref.load %arg2[%c38] : memref<64xf32, #tpu.memory_space<smem>>
    %229 = vector.broadcast %228 : f32 to vector<1x2048xf32>
    %230 = arith.select %227, %229, %224 : vector<1x2048xi1>, vector<1x2048xf32>
    %c38_40 = arith.constant 38 : index
    %231 = memref.load %arg1[%c38_40] : memref<63xf32, #tpu.memory_space<smem>>
    %232 = vector.broadcast %231 : f32 to vector<1x2048xf32>
    %233 = arith.cmpf ogt, %0, %232 : vector<1x2048xf32>
    %c39 = arith.constant 39 : index
    %234 = memref.load %arg2[%c39] : memref<64xf32, #tpu.memory_space<smem>>
    %235 = vector.broadcast %234 : f32 to vector<1x2048xf32>
    %236 = arith.select %233, %235, %230 : vector<1x2048xi1>, vector<1x2048xf32>
    %c39_41 = arith.constant 39 : index
    %237 = memref.load %arg1[%c39_41] : memref<63xf32, #tpu.memory_space<smem>>
    %238 = vector.broadcast %237 : f32 to vector<1x2048xf32>
    %239 = arith.cmpf ogt, %0, %238 : vector<1x2048xf32>
    %c40 = arith.constant 40 : index
    %240 = memref.load %arg2[%c40] : memref<64xf32, #tpu.memory_space<smem>>
    %241 = vector.broadcast %240 : f32 to vector<1x2048xf32>
    %242 = arith.select %239, %241, %236 : vector<1x2048xi1>, vector<1x2048xf32>
    %c40_42 = arith.constant 40 : index
    %243 = memref.load %arg1[%c40_42] : memref<63xf32, #tpu.memory_space<smem>>
    %244 = vector.broadcast %243 : f32 to vector<1x2048xf32>
    %245 = arith.cmpf ogt, %0, %244 : vector<1x2048xf32>
    %c41 = arith.constant 41 : index
    %246 = memref.load %arg2[%c41] : memref<64xf32, #tpu.memory_space<smem>>
    %247 = vector.broadcast %246 : f32 to vector<1x2048xf32>
    %248 = arith.select %245, %247, %242 : vector<1x2048xi1>, vector<1x2048xf32>
    %c41_43 = arith.constant 41 : index
    %249 = memref.load %arg1[%c41_43] : memref<63xf32, #tpu.memory_space<smem>>
    %250 = vector.broadcast %249 : f32 to vector<1x2048xf32>
    %251 = arith.cmpf ogt, %0, %250 : vector<1x2048xf32>
    %c42 = arith.constant 42 : index
    %252 = memref.load %arg2[%c42] : memref<64xf32, #tpu.memory_space<smem>>
    %253 = vector.broadcast %252 : f32 to vector<1x2048xf32>
    %254 = arith.select %251, %253, %248 : vector<1x2048xi1>, vector<1x2048xf32>
    %c42_44 = arith.constant 42 : index
    %255 = memref.load %arg1[%c42_44] : memref<63xf32, #tpu.memory_space<smem>>
    %256 = vector.broadcast %255 : f32 to vector<1x2048xf32>
    %257 = arith.cmpf ogt, %0, %256 : vector<1x2048xf32>
    %c43 = arith.constant 43 : index
    %258 = memref.load %arg2[%c43] : memref<64xf32, #tpu.memory_space<smem>>
    %259 = vector.broadcast %258 : f32 to vector<1x2048xf32>
    %260 = arith.select %257, %259, %254 : vector<1x2048xi1>, vector<1x2048xf32>
    %c43_45 = arith.constant 43 : index
    %261 = memref.load %arg1[%c43_45] : memref<63xf32, #tpu.memory_space<smem>>
    %262 = vector.broadcast %261 : f32 to vector<1x2048xf32>
    %263 = arith.cmpf ogt, %0, %262 : vector<1x2048xf32>
    %c44 = arith.constant 44 : index
    %264 = memref.load %arg2[%c44] : memref<64xf32, #tpu.memory_space<smem>>
    %265 = vector.broadcast %264 : f32 to vector<1x2048xf32>
    %266 = arith.select %263, %265, %260 : vector<1x2048xi1>, vector<1x2048xf32>
    %c44_46 = arith.constant 44 : index
    %267 = memref.load %arg1[%c44_46] : memref<63xf32, #tpu.memory_space<smem>>
    %268 = vector.broadcast %267 : f32 to vector<1x2048xf32>
    %269 = arith.cmpf ogt, %0, %268 : vector<1x2048xf32>
    %c45 = arith.constant 45 : index
    %270 = memref.load %arg2[%c45] : memref<64xf32, #tpu.memory_space<smem>>
    %271 = vector.broadcast %270 : f32 to vector<1x2048xf32>
    %272 = arith.select %269, %271, %266 : vector<1x2048xi1>, vector<1x2048xf32>
    %c45_47 = arith.constant 45 : index
    %273 = memref.load %arg1[%c45_47] : memref<63xf32, #tpu.memory_space<smem>>
    %274 = vector.broadcast %273 : f32 to vector<1x2048xf32>
    %275 = arith.cmpf ogt, %0, %274 : vector<1x2048xf32>
    %c46 = arith.constant 46 : index
    %276 = memref.load %arg2[%c46] : memref<64xf32, #tpu.memory_space<smem>>
    %277 = vector.broadcast %276 : f32 to vector<1x2048xf32>
    %278 = arith.select %275, %277, %272 : vector<1x2048xi1>, vector<1x2048xf32>
    %c46_48 = arith.constant 46 : index
    %279 = memref.load %arg1[%c46_48] : memref<63xf32, #tpu.memory_space<smem>>
    %280 = vector.broadcast %279 : f32 to vector<1x2048xf32>
    %281 = arith.cmpf ogt, %0, %280 : vector<1x2048xf32>
    %c47 = arith.constant 47 : index
    %282 = memref.load %arg2[%c47] : memref<64xf32, #tpu.memory_space<smem>>
    %283 = vector.broadcast %282 : f32 to vector<1x2048xf32>
    %284 = arith.select %281, %283, %278 : vector<1x2048xi1>, vector<1x2048xf32>
    %c47_49 = arith.constant 47 : index
    %285 = memref.load %arg1[%c47_49] : memref<63xf32, #tpu.memory_space<smem>>
    %286 = vector.broadcast %285 : f32 to vector<1x2048xf32>
    %287 = arith.cmpf ogt, %0, %286 : vector<1x2048xf32>
    %c48 = arith.constant 48 : index
    %288 = memref.load %arg2[%c48] : memref<64xf32, #tpu.memory_space<smem>>
    %289 = vector.broadcast %288 : f32 to vector<1x2048xf32>
    %290 = arith.select %287, %289, %284 : vector<1x2048xi1>, vector<1x2048xf32>
    %c48_50 = arith.constant 48 : index
    %291 = memref.load %arg1[%c48_50] : memref<63xf32, #tpu.memory_space<smem>>
    %292 = vector.broadcast %291 : f32 to vector<1x2048xf32>
    %293 = arith.cmpf ogt, %0, %292 : vector<1x2048xf32>
    %c49 = arith.constant 49 : index
    %294 = memref.load %arg2[%c49] : memref<64xf32, #tpu.memory_space<smem>>
    %295 = vector.broadcast %294 : f32 to vector<1x2048xf32>
    %296 = arith.select %293, %295, %290 : vector<1x2048xi1>, vector<1x2048xf32>
    %c49_51 = arith.constant 49 : index
    %297 = memref.load %arg1[%c49_51] : memref<63xf32, #tpu.memory_space<smem>>
    %298 = vector.broadcast %297 : f32 to vector<1x2048xf32>
    %299 = arith.cmpf ogt, %0, %298 : vector<1x2048xf32>
    %c50 = arith.constant 50 : index
    %300 = memref.load %arg2[%c50] : memref<64xf32, #tpu.memory_space<smem>>
    %301 = vector.broadcast %300 : f32 to vector<1x2048xf32>
    %302 = arith.select %299, %301, %296 : vector<1x2048xi1>, vector<1x2048xf32>
    %c50_52 = arith.constant 50 : index
    %303 = memref.load %arg1[%c50_52] : memref<63xf32, #tpu.memory_space<smem>>
    %304 = vector.broadcast %303 : f32 to vector<1x2048xf32>
    %305 = arith.cmpf ogt, %0, %304 : vector<1x2048xf32>
    %c51 = arith.constant 51 : index
    %306 = memref.load %arg2[%c51] : memref<64xf32, #tpu.memory_space<smem>>
    %307 = vector.broadcast %306 : f32 to vector<1x2048xf32>
    %308 = arith.select %305, %307, %302 : vector<1x2048xi1>, vector<1x2048xf32>
    %c51_53 = arith.constant 51 : index
    %309 = memref.load %arg1[%c51_53] : memref<63xf32, #tpu.memory_space<smem>>
    %310 = vector.broadcast %309 : f32 to vector<1x2048xf32>
    %311 = arith.cmpf ogt, %0, %310 : vector<1x2048xf32>
    %c52 = arith.constant 52 : index
    %312 = memref.load %arg2[%c52] : memref<64xf32, #tpu.memory_space<smem>>
    %313 = vector.broadcast %312 : f32 to vector<1x2048xf32>
    %314 = arith.select %311, %313, %308 : vector<1x2048xi1>, vector<1x2048xf32>
    %c52_54 = arith.constant 52 : index
    %315 = memref.load %arg1[%c52_54] : memref<63xf32, #tpu.memory_space<smem>>
    %316 = vector.broadcast %315 : f32 to vector<1x2048xf32>
    %317 = arith.cmpf ogt, %0, %316 : vector<1x2048xf32>
    %c53 = arith.constant 53 : index
    %318 = memref.load %arg2[%c53] : memref<64xf32, #tpu.memory_space<smem>>
    %319 = vector.broadcast %318 : f32 to vector<1x2048xf32>
    %320 = arith.select %317, %319, %314 : vector<1x2048xi1>, vector<1x2048xf32>
    %c53_55 = arith.constant 53 : index
    %321 = memref.load %arg1[%c53_55] : memref<63xf32, #tpu.memory_space<smem>>
    %322 = vector.broadcast %321 : f32 to vector<1x2048xf32>
    %323 = arith.cmpf ogt, %0, %322 : vector<1x2048xf32>
    %c54 = arith.constant 54 : index
    %324 = memref.load %arg2[%c54] : memref<64xf32, #tpu.memory_space<smem>>
    %325 = vector.broadcast %324 : f32 to vector<1x2048xf32>
    %326 = arith.select %323, %325, %320 : vector<1x2048xi1>, vector<1x2048xf32>
    %c54_56 = arith.constant 54 : index
    %327 = memref.load %arg1[%c54_56] : memref<63xf32, #tpu.memory_space<smem>>
    %328 = vector.broadcast %327 : f32 to vector<1x2048xf32>
    %329 = arith.cmpf ogt, %0, %328 : vector<1x2048xf32>
    %c55 = arith.constant 55 : index
    %330 = memref.load %arg2[%c55] : memref<64xf32, #tpu.memory_space<smem>>
    %331 = vector.broadcast %330 : f32 to vector<1x2048xf32>
    %332 = arith.select %329, %331, %326 : vector<1x2048xi1>, vector<1x2048xf32>
    %c55_57 = arith.constant 55 : index
    %333 = memref.load %arg1[%c55_57] : memref<63xf32, #tpu.memory_space<smem>>
    %334 = vector.broadcast %333 : f32 to vector<1x2048xf32>
    %335 = arith.cmpf ogt, %0, %334 : vector<1x2048xf32>
    %c56 = arith.constant 56 : index
    %336 = memref.load %arg2[%c56] : memref<64xf32, #tpu.memory_space<smem>>
    %337 = vector.broadcast %336 : f32 to vector<1x2048xf32>
    %338 = arith.select %335, %337, %332 : vector<1x2048xi1>, vector<1x2048xf32>
    %c56_58 = arith.constant 56 : index
    %339 = memref.load %arg1[%c56_58] : memref<63xf32, #tpu.memory_space<smem>>
    %340 = vector.broadcast %339 : f32 to vector<1x2048xf32>
    %341 = arith.cmpf ogt, %0, %340 : vector<1x2048xf32>
    %c57 = arith.constant 57 : index
    %342 = memref.load %arg2[%c57] : memref<64xf32, #tpu.memory_space<smem>>
    %343 = vector.broadcast %342 : f32 to vector<1x2048xf32>
    %344 = arith.select %341, %343, %338 : vector<1x2048xi1>, vector<1x2048xf32>
    %c57_59 = arith.constant 57 : index
    %345 = memref.load %arg1[%c57_59] : memref<63xf32, #tpu.memory_space<smem>>
    %346 = vector.broadcast %345 : f32 to vector<1x2048xf32>
    %347 = arith.cmpf ogt, %0, %346 : vector<1x2048xf32>
    %c58 = arith.constant 58 : index
    %348 = memref.load %arg2[%c58] : memref<64xf32, #tpu.memory_space<smem>>
    %349 = vector.broadcast %348 : f32 to vector<1x2048xf32>
    %350 = arith.select %347, %349, %344 : vector<1x2048xi1>, vector<1x2048xf32>
    %c58_60 = arith.constant 58 : index
    %351 = memref.load %arg1[%c58_60] : memref<63xf32, #tpu.memory_space<smem>>
    %352 = vector.broadcast %351 : f32 to vector<1x2048xf32>
    %353 = arith.cmpf ogt, %0, %352 : vector<1x2048xf32>
    %c59 = arith.constant 59 : index
    %354 = memref.load %arg2[%c59] : memref<64xf32, #tpu.memory_space<smem>>
    %355 = vector.broadcast %354 : f32 to vector<1x2048xf32>
    %356 = arith.select %353, %355, %350 : vector<1x2048xi1>, vector<1x2048xf32>
    %c59_61 = arith.constant 59 : index
    %357 = memref.load %arg1[%c59_61] : memref<63xf32, #tpu.memory_space<smem>>
    %358 = vector.broadcast %357 : f32 to vector<1x2048xf32>
    %359 = arith.cmpf ogt, %0, %358 : vector<1x2048xf32>
    %c60 = arith.constant 60 : index
    %360 = memref.load %arg2[%c60] : memref<64xf32, #tpu.memory_space<smem>>
    %361 = vector.broadcast %360 : f32 to vector<1x2048xf32>
    %362 = arith.select %359, %361, %356 : vector<1x2048xi1>, vector<1x2048xf32>
    %c60_62 = arith.constant 60 : index
    %363 = memref.load %arg1[%c60_62] : memref<63xf32, #tpu.memory_space<smem>>
    %364 = vector.broadcast %363 : f32 to vector<1x2048xf32>
    %365 = arith.cmpf ogt, %0, %364 : vector<1x2048xf32>
    %c61 = arith.constant 61 : index
    %366 = memref.load %arg2[%c61] : memref<64xf32, #tpu.memory_space<smem>>
    %367 = vector.broadcast %366 : f32 to vector<1x2048xf32>
    %368 = arith.select %365, %367, %362 : vector<1x2048xi1>, vector<1x2048xf32>
    %c61_63 = arith.constant 61 : index
    %369 = memref.load %arg1[%c61_63] : memref<63xf32, #tpu.memory_space<smem>>
    %370 = vector.broadcast %369 : f32 to vector<1x2048xf32>
    %371 = arith.cmpf ogt, %0, %370 : vector<1x2048xf32>
    %c62 = arith.constant 62 : index
    %372 = memref.load %arg2[%c62] : memref<64xf32, #tpu.memory_space<smem>>
    %373 = vector.broadcast %372 : f32 to vector<1x2048xf32>
    %374 = arith.select %371, %373, %368 : vector<1x2048xi1>, vector<1x2048xf32>
    %c62_64 = arith.constant 62 : index
    %375 = memref.load %arg1[%c62_64] : memref<63xf32, #tpu.memory_space<smem>>
    %376 = vector.broadcast %375 : f32 to vector<1x2048xf32>
    %377 = arith.cmpf ogt, %0, %376 : vector<1x2048xf32>
    %c63 = arith.constant 63 : index
    %378 = memref.load %arg2[%c63] : memref<64xf32, #tpu.memory_space<smem>>
    %379 = vector.broadcast %378 : f32 to vector<1x2048xf32>
    %380 = arith.select %377, %379, %374 : vector<1x2048xi1>, vector<1x2048xf32>
    %c0_65 = arith.constant 0 : index
    %c0_66 = arith.constant 0 : index
    %381 = vector.load %arg4[%c0_65, %c0_66] : memref<1x2048xf32, #tpu.memory_space<vmem>>, vector<1x2048xf32>
    tpu.vector_store %arg4[%c0_65, %c0_66], %380 {strides = array<i32>} : memref<1x2048xf32, #tpu.memory_space<vmem>>, vector<1x2048xf32>,
    return
  }
  func.func @transform_0(%arg0: i32) -> i32 {
    %c0_i32 = arith.constant 0 : i32
    %c0_i32_0 = arith.constant 0 : i32
    return %c0_i32 : i32
  }
  func.func @transform_1(%arg0: i32) -> i32 {
    %c0_i32 = arith.constant 0 : i32
    %c0_i32_0 = arith.constant 0 : i32
    return %c0_i32 : i32
  }
  func.func @transform_2(%arg0: i32) -> (i32, i32) {
    %c0_i32 = arith.constant 0 : i32
    %c0_i32_0 = arith.constant 0 : i32
    return %arg0, %c0_i32 : i32, i32
  }
  func.func @transform_3(%arg0: i32) -> (i32, i32) {
    %c0_i32 = arith.constant 0 : i32
    %c0_i32_0 = arith.constant 0 : i32
    return %arg0, %c0_i32 : i32, i32
  }
}

</mosaic_0001>

<llo_original>
// kernel: tpu_custom_call.1
$region0: #{tpu_custom_call.1}
  #allocation0 [shape = 'u32[]', space=smem, size = 0x4, offset = 0x4, fixed_abs, tag = 'smem constant byte address 0x4 - core index']
  #allocation1 [shape = 'u32[72,128]{1,0:T(1,128)}', space=vmem, size = 0x9000, scoped, tag = 'internal scratch']
  %s0 = inlined_call_operand.hbm [shape: f32[63], index: 0, kind: input, shape index: {}]
  %s1 = inlined_call_operand.hbm [shape: f32[64], index: 1, kind: input, shape index: {}]
  %s2 = inlined_call_operand.hbm [shape: f32[1,2048], index: 2, kind: input, shape index: {}]
  %s3 = inlined_call_operand.hbm [shape: f32[1,2048], index: 3, kind: output, shape index: {}]
  %s4 = sld [smem:[#allocation0]]
  $region34: #{tpu_custom_call.1} parent=0
    _
  %s6 = ssub.s32 1, %s4
  %s7 = scalar_select 0, %s6, %s4
  $region1: #{tpu_custom_call.1} parent=0
    #allocation2 [shape = 'u8[512]{0}', space=smem, size = 0x200, scoped, tag = 'input window, operand 0, single buffered']
    #allocation3 [shape = 's32[1]{0}', space=sflag, size = 0x4, scoped, tag = 'scoped memory for tpu_custom_call.1']
    #allocation4 [shape = 's32[1]{0}', space=sflag, size = 0x4, scoped, tag = 'scoped memory for tpu_custom_call.1']
    #allocation5 [shape = 's32[1]{0}', space=sflag, size = 0x4, scoped, tag = 'scoped memory for tpu_custom_call.1']
    #allocation6 [shape = 'u8[512]{0}', space=smem, size = 0x200, scoped, tag = 'input window, operand 1, single buffered']
    #allocation7 [shape = 's32[1]{0}', space=sflag, size = 0x4, scoped, tag = 'scoped memory for tpu_custom_call.1']
    #allocation8 [shape = 'u8[8192]{0}', space=vmem, size = 0x2000, scoped, tag = 'input window, operand 2, single buffered']
    #allocation9 [shape = 'u8[8192]{0}', space=vmem, size = 0x2000, scoped, tag = 'output window, operand 0, single buffered']
    %8 = vsyncpa [#allocation5], 0
    %9 = vsyncpa [#allocation7], 0
    %10 = vsyncpa [#allocation3], 0
    %11 = vsyncpa [#allocation4], 0
    // Predicated region
    $region2: #{tpu_custom_call.1} parent=1 // pred_check
      _
    $region3: #{tpu_custom_call.1} parent=1 // pred_check_branch
      %13 = sbr.rel (0) target = $region5
    $region4: #{tpu_custom_call.1} parent=1 // pred_region
      %15 = vsyncadd [#allocation5], 0
      %s17 = sshll.u32 %s0, 4
      %s18 = int_to_ptr.hbm [resolvable:$true] %s17
      %20 = dma.hbm_to_smem %s18, 16, [#allocation2], [#allocation5]
    $region5: #{tpu_custom_call.1} parent=1 // pred_fallthru
      _
    // Predicated region
    $region6: #{tpu_custom_call.1} parent=1 // pred_check
      _
    $region7: #{tpu_custom_call.1} parent=1 // pred_check_branch
      %22 = sbr.rel (0) target = $region9
    $region8: #{tpu_custom_call.1} parent=1 // pred_region
      %24 = vsyncadd [#allocation7], 0
      %s26 = sshll.u32 %s1, 4
      %s27 = int_to_ptr.hbm [resolvable:$true] %s26
      %29 = dma.hbm_to_smem %s27, 16, [#allocation6], [#allocation7]
    $region9: #{tpu_custom_call.1} parent=1 // pred_fallthru
      _
    // Predicated region
    $region10: #{tpu_custom_call.1} parent=1 // pred_check
      _
    $region11: #{tpu_custom_call.1} parent=1 // pred_check_branch
      %31 = sbr.rel (0) target = $region13
    $region12: #{tpu_custom_call.1} parent=1 // pred_region
      %33 = vsyncadd [#allocation3], 0
      %s35 = sshll.u32 %s2, 4
      %s36 = int_to_ptr.hbm [resolvable:$true] %s35
      %s37 = sshll.u32 [#allocation8], 4
      %s38 = int_to_ptr.vmem [resolvable:$true] %s37
      %40 = dma.hbm_to_vmem [thread:$0]  %s36, 256, %s38, [#allocation3]
    $region13: #{tpu_custom_call.1} parent=1 // pred_fallthru
      _
    // Predicated region
    $region14: #{tpu_custom_call.1} parent=1 // pred_check
      _
    $region15: #{tpu_custom_call.1} parent=1 // pred_check_branch
      %42 = sbr.rel (0) target = $region17
    $region16: #{tpu_custom_call.1} parent=1 // pred_region
      %44 = dma.done [#allocation5], 16
    $region17: #{tpu_custom_call.1} parent=1 // pred_fallthru
      _
    // Predicated region
    $region18: #{tpu_custom_call.1} parent=1 // pred_check
      _
    $region19: #{tpu_custom_call.1} parent=1 // pred_check_branch
      %46 = sbr.rel (0) target = $region21
    $region20: #{tpu_custom_call.1} parent=1 // pred_region
      %48 = dma.done [#allocation7], 16
    $region21: #{tpu_custom_call.1} parent=1 // pred_fallthru
      _
    // Predicated region
    $region22: #{tpu_custom_call.1} parent=1 // pred_check
      _
    $region23: #{tpu_custom_call.1} parent=1 // pred_check_branch
      %50 = sbr.rel (0) target = $region25
    $region24: #{tpu_custom_call.1} parent=1 // pred_region
      %52 = dma.done [#allocation3], 256
    $region25: #{tpu_custom_call.1} parent=1 // pred_fallthru
      _
    %53 = sfence
    %v54 = vld [vmem:[#allocation8] sm:$0xff]
    %v55 = vld [vmem:[#allocation8 + $0x8] sm:$0xff]
    %s56 = sld [smem:[#allocation2]]
    %v57 = vstv %s56
    %vm58 = vcmp.gt.f32.partialorder %v54, %v57
    %vm59 = vcmp.gt.f32.partialorder %v55, %v57
    %s60 = sld [smem:[#allocation6 + $0x1]]
    %s61 = sld [smem:[#allocation6]]
    %v62 = vstv %s60
    %v63 = vstv %s61
    %v64 = vsel %vm58, %v62, %v63
    %v65 = vsel %vm59, %v62, %v63
    %s66 = sld [smem:[#allocation2 + $0x1]]
    %v67 = vstv %s66
    %vm68 = vcmp.gt.f32.partialorder %v54, %v67
    %vm69 = vcmp.gt.f32.partialorder %v55, %v67
    %s70 = sld [smem:[#allocation6 + $0x2]]
    %v71 = vstv %s70
    %v72 = vsel %vm68, %v71, %v64
    %v73 = vsel %vm69, %v71, %v65
    %s74 = sld [smem:[#allocation2 + $0x2]]
    %v75 = vstv %s74
    %vm76 = vcmp.gt.f32.partialorder %v54, %v75
    %vm77 = vcmp.gt.f32.partialorder %v55, %v75
    %s78 = sld [smem:[#allocation6 + $0x3]]
    %v79 = vstv %s78
    %v80 = vsel %vm76, %v79, %v72
    %v81 = vsel %vm77, %v79, %v73
    %s82 = sld [smem:[#allocation2 + $0x3]]
    %v83 = vstv %s82
    %vm84 = vcmp.gt.f32.partialorder %v54, %v83
    %vm85 = vcmp.gt.f32.partialorder %v55, %v83
    %s86 = sld [smem:[#allocation6 + $0x4]]
    %v87 = vstv %s86
    %v88 = vsel %vm84, %v87, %v80
    %v89 = vsel %vm85, %v87, %v81
    %s90 = sld [smem:[#allocation2 + $0x4]]
    %v91 = vstv %s90
    %vm92 = vcmp.gt.f32.partialorder %v54, %v91
    %vm93 = vcmp.gt.f32.partialorder %v55, %v91
    %s94 = sld [smem:[#allocation6 + $0x5]]
    %v95 = vstv %s94
    %v96 = vsel %vm92, %v95, %v88
    %v97 = vsel %vm93, %v95, %v89
    %s98 = sld [smem:[#allocation2 + $0x5]]
    %v99 = vstv %s98
    %vm100 = vcmp.gt.f32.partialorder %v54, %v99
    %vm101 = vcmp.gt.f32.partialorder %v55, %v99
    %s102 = sld [smem:[#allocation6 + $0x6]]
    %v103 = vstv %s102
    %v104 = vsel %vm100, %v103, %v96
    %v105 = vsel %vm101, %v103, %v97
    %s106 = sld [smem:[#allocation2 + $0x6]]
    %v107 = vstv %s106
    %vm108 = vcmp.gt.f32.partialorder %v54, %v107
    %vm109 = vcmp.gt.f32.partialorder %v55, %v107
    %s110 = sld [smem:[#allocation6 + $0x7]]
    %v111 = vstv %s110
    %v112 = vsel %vm108, %v111, %v104
    %v113 = vsel %vm109, %v111, %v105
    %s114 = sld [smem:[#allocation2 + $0x7]]
    %v115 = vstv %s114
    %vm116 = vcmp.gt.f32.partialorder %v54, %v115
    %vm117 = vcmp.gt.f32.partialorder %v55, %v115
    %s118 = sld [smem:[#allocation6 + $0x8]]
    %v119 = vstv %s118
    %v120 = vsel %vm116, %v119, %v112
    %v121 = vsel %vm117, %v119, %v113
    %s122 = sld [smem:[#allocation2 + $0x8]]
    %v123 = vstv %s122
    %vm124 = vcmp.gt.f32.partialorder %v54, %v123
    %vm125 = vcmp.gt.f32.partialorder %v55, %v123
    %s126 = sld [smem:[#allocation6 + $0x9]]
    %v127 = vstv %s126
    %v128 = vsel %vm124, %v127, %v120
    %v129 = vsel %vm125, %v127, %v121
    %s130 = sld [smem:[#allocation2 + $0x9]]
    %v131 = vstv %s130
    %vm132 = vcmp.gt.f32.partialorder %v54, %v131
    %vm133 = vcmp.gt.f32.partialorder %v55, %v131
    %s134 = sld [smem:[#allocation6 + $0xa]]
    %v135 = vstv %s134
    %v136 = vsel %vm132, %v135, %v128
    %v137 = vsel %vm133, %v135, %v129
    %s138 = sld [smem:[#allocation2 + $0xa]]
    %v139 = vstv %s138
    %vm140 = vcmp.gt.f32.partialorder %v54, %v139
    %vm141 = vcmp.gt.f32.partialorder %v55, %v139
    %s142 = sld [smem:[#allocation6 + $0xb]]
    %v143 = vstv %s142
    %v144 = vsel %vm140, %v143, %v136
    %v145 = vsel %vm141, %v143, %v137
    %s146 = sld [smem:[#allocation2 + $0xb]]
    %v147 = vstv %s146
    %vm148 = vcmp.gt.f32.partialorder %v54, %v147
    %vm149 = vcmp.gt.f32.partialorder %v55, %v147
    %s150 = sld [smem:[#allocation6 + $0xc]]
    %v151 = vstv %s150
    %v152 = vsel %vm148, %v151, %v144
    %v153 = vsel %vm149, %v151, %v145
    %s154 = sld [smem:[#allocation2 + $0xc]]
    %v155 = vstv %s154
    %vm156 = vcmp.gt.f32.partialorder %v54, %v155
    %vm157 = vcmp.gt.f32.partialorder %v55, %v155
    %s158 = sld [smem:[#allocation6 + $0xd]]
    %v159 = vstv %s158
    %v160 = vsel %vm156, %v159, %v152
    %v161 = vsel %vm157, %v159, %v153
    %s162 = sld [smem:[#allocation2 + $0xd]]
    %v163 = vstv %s162
    %vm164 = vcmp.gt.f32.partialorder %v54, %v163
    %vm165 = vcmp.gt.f32.partialorder %v55, %v163
    %s166 = sld [smem:[#allocation6 + $0xe]]
    %v167 = vstv %s166
    %v168 = vsel %vm164, %v167, %v160
    %v169 = vsel %vm165, %v167, %v161
    %s170 = sld [smem:[#allocation2 + $0xe]]
    %v171 = vstv %s170
    %vm172 = vcmp.gt.f32.partialorder %v54, %v171
    %vm173 = vcmp.gt.f32.partialorder %v55, %v171
    %s174 = sld [smem:[#allocation6 + $0xf]]
    %v175 = vstv %s174
    %v176 = vsel %vm172, %v175, %v168
    %v177 = vsel %vm173, %v175, %v169
    %s178 = sld [smem:[#allocation2 + $0xf]]
    %v179 = vstv %s178
    %vm180 = vcmp.gt.f32.partialorder %v54, %v179
    %vm181 = vcmp.gt.f32.partialorder %v55, %v179
    %s182 = sld [smem:[#allocation6 + $0x10]]
    %v183 = vstv %s182
    %v184 = vsel %vm180, %v183, %v176
    %v185 = vsel %vm181, %v183, %v177
    %s186 = sld [smem:[#allocation2 + $0x10]]
    %v187 = vstv %s186
    %vm188 = vcmp.gt.f32.partialorder %v54, %v187
    %vm189 = vcmp.gt.f32.partialorder %v55, %v187
    %s190 = sld [smem:[#allocation6 + $0x11]]
    %v191 = vstv %s190
    %v192 = vsel %vm188, %v191, %v184
    %v193 = vsel %vm189, %v191, %v185
    %s194 = sld [smem:[#allocation2 + $0x11]]
    %v195 = vstv %s194
    %vm196 = vcmp.gt.f32.partialorder %v54, %v195
    %vm197 = vcmp.gt.f32.partialorder %v55, %v195
    %s198 = sld [smem:[#allocation6 + $0x12]]
    %v199 = vstv %s198
    %v200 = vsel %vm196, %v199, %v192
    %v201 = vsel %vm197, %v199, %v193
    %s202 = sld [smem:[#allocation2 + $0x12]]
    %v203 = vstv %s202
    %vm204 = vcmp.gt.f32.partialorder %v54, %v203
    %vm205 = vcmp.gt.f32.partialorder %v55, %v203
    %s206 = sld [smem:[#allocation6 + $0x13]]
    %v207 = vstv %s206
    %v208 = vsel %vm204, %v207, %v200
    %v209 = vsel %vm205, %v207, %v201
    %s210 = sld [smem:[#allocation2 + $0x13]]
    %v211 = vstv %s210
    %vm212 = vcmp.gt.f32.partialorder %v54, %v211
    %vm213 = vcmp.gt.f32.partialorder %v55, %v211
    %s214 = sld [smem:[#allocation6 + $0x14]]
    %v215 = vstv %s214
    %v216 = vsel %vm212, %v215, %v208
    %v217 = vsel %vm213, %v215, %v209
    %s218 = sld [smem:[#allocation2 + $0x14]]
    %v219 = vstv %s218
    %vm220 = vcmp.gt.f32.partialorder %v54, %v219
    %vm221 = vcmp.gt.f32.partialorder %v55, %v219
    %s222 = sld [smem:[#allocation6 + $0x15]]
    %v223 = vstv %s222
    %v224 = vsel %vm220, %v223, %v216
    %v225 = vsel %vm221, %v223, %v217
    %s226 = sld [smem:[#allocation2 + $0x15]]
    %v227 = vstv %s226
    %vm228 = vcmp.gt.f32.partialorder %v54, %v227
    %vm229 = vcmp.gt.f32.partialorder %v55, %v227
    %s230 = sld [smem:[#allocation6 + $0x16]]
    %v231 = vstv %s230
    %v232 = vsel %vm228, %v231, %v224
    %v233 = vsel %vm229, %v231, %v225
    %s234 = sld [smem:[#allocation2 + $0x16]]
    %v235 = vstv %s234
    %vm236 = vcmp.gt.f32.partialorder %v54, %v235
    %vm237 = vcmp.gt.f32.partialorder %v55, %v235
    %s238 = sld [smem:[#allocation6 + $0x17]]
    %v239 = vstv %s238
    %v240 = vsel %vm236, %v239, %v232
    %v241 = vsel %vm237, %v239, %v233
    %s242 = sld [smem:[#allocation2 + $0x17]]
    %v243 = vstv %s242
    %vm244 = vcmp.gt.f32.partialorder %v54, %v243
    %vm245 = vcmp.gt.f32.partialorder %v55, %v243
    %s246 = sld [smem:[#allocation6 + $0x18]]
    %v247 = vstv %s246
    %v248 = vsel %vm244, %v247, %v240
    %v249 = vsel %vm245, %v247, %v241
    %s250 = sld [smem:[#allocation2 + $0x18]]
    %v251 = vstv %s250
    %vm252 = vcmp.gt.f32.partialorder %v54, %v251
    %vm253 = vcmp.gt.f32.partialorder %v55, %v251
    %s254 = sld [smem:[#allocation6 + $0x19]]
    %v255 = vstv %s254
    %v256 = vsel %vm252, %v255, %v248
    %v257 = vsel %vm253, %v255, %v249
    %s258 = sld [smem:[#allocation2 + $0x19]]
    %v259 = vstv %s258
    %vm260 = vcmp.gt.f32.partialorder %v54, %v259
    %vm261 = vcmp.gt.f32.partialorder %v55, %v259
    %s262 = sld [smem:[#allocation6 + $0x1a]]
    %v263 = vstv %s262
    %v264 = vsel %vm260, %v263, %v256
    %v265 = vsel %vm261, %v263, %v257
    %s266 = sld [smem:[#allocation2 + $0x1a]]
    %v267 = vstv %s266
    %vm268 = vcmp.gt.f32.partialorder %v54, %v267
    %vm269 = vcmp.gt.f32.partialorder %v55, %v267
    %s270 = sld [smem:[#allocation6 + $0x1b]]
    %v271 = vstv %s270
    %v272 = vsel %vm268, %v271, %v264
    %v273 = vsel %vm269, %v271, %v265
    %s274 = sld [smem:[#allocation2 + $0x1b]]
    %v275 = vstv %s274
    %vm276 = vcmp.gt.f32.partialorder %v54, %v275
    %vm277 = vcmp.gt.f32.partialorder %v55, %v275
    %s278 = sld [smem:[#allocation6 + $0x1c]]
    %v279 = vstv %s278
    %v280 = vsel %vm276, %v279, %v272
    %v281 = vsel %vm277, %v279, %v273
    %s282 = sld [smem:[#allocation2 + $0x1c]]
    %v283 = vstv %s282
    %vm284 = vcmp.gt.f32.partialorder %v54, %v283
    %vm285 = vcmp.gt.f32.partialorder %v55, %v283
    %s286 = sld [smem:[#allocation6 + $0x1d]]
    %v287 = vstv %s286
    %v288 = vsel %vm284, %v287, %v280
    %v289 = vsel %vm285, %v287, %v281
    %s290 = sld [smem:[#allocation2 + $0x1d]]
    %v291 = vstv %s290
    %vm292 = vcmp.gt.f32.partialorder %v54, %v291
    %vm293 = vcmp.gt.f32.partialorder %v55, %v291
    %s294 = sld [smem:[#allocation6 + $0x1e]]
    %v295 = vstv %s294
    %v296 = vsel %vm292, %v295, %v288
    %v297 = vsel %vm293, %v295, %v289
    %s298 = sld [smem:[#allocation2 + $0x1e]]
    %v299 = vstv %s298
    %vm300 = vcmp.gt.f32.partialorder %v54, %v299
    %vm301 = vcmp.gt.f32.partialorder %v55, %v299
    %s302 = sld [smem:[#allocation6 + $0x1f]]
    %v303 = vstv %s302
    %v304 = vsel %vm300, %v303, %v296
    %v305 = vsel %vm301, %v303, %v297
    %s306 = sld [smem:[#allocation2 + $0x1f]]
    %v307 = vstv %s306
    %vm308 = vcmp.gt.f32.partialorder %v54, %v307
    %vm309 = vcmp.gt.f32.partialorder %v55, %v307
    %s310 = sld [smem:[#allocation6 + $0x20]]
    %v311 = vstv %s310
    %v312 = vsel %vm308, %v311, %v304
    %v313 = vsel %vm309, %v311, %v305
    %s314 = sld [smem:[#allocation2 + $0x20]]
    %v315 = vstv %s314
    %vm316 = vcmp.gt.f32.partialorder %v54, %v315
    %vm317 = vcmp.gt.f32.partialorder %v55, %v315
    %s318 = sld [smem:[#allocation6 + $0x21]]
    %v319 = vstv %s318
    %v320 = vsel %vm316, %v319, %v312
    %v321 = vsel %vm317, %v319, %v313
    %s322 = sld [smem:[#allocation2 + $0x21]]
    %v323 = vstv %s322
    %vm324 = vcmp.gt.f32.partialorder %v54, %v323
    %vm325 = vcmp.gt.f32.partialorder %v55, %v323
    %s326 = sld [smem:[#allocation6 + $0x22]]
    %v327 = vstv %s326
    %v328 = vsel %vm324, %v327, %v320
    %v329 = vsel %vm325, %v327, %v321
    %s330 = sld [smem:[#allocation2 + $0x22]]
    %v331 = vstv %s330
    %vm332 = vcmp.gt.f32.partialorder %v54, %v331
    %vm333 = vcmp.gt.f32.partialorder %v55, %v331
    %s334 = sld [smem:[#allocation6 + $0x23]]
    %v335 = vstv %s334
    %v336 = vsel %vm332, %v335, %v328
    %v337 = vsel %vm333, %v335, %v329
    %s338 = sld [smem:[#allocation2 + $0x23]]
    %v339 = vstv %s338
    %vm340 = vcmp.gt.f32.partialorder %v54, %v339
    %vm341 = vcmp.gt.f32.partialorder %v55, %v339
    %s342 = sld [smem:[#allocation6 + $0x24]]
    %v343 = vstv %s342
    %v344 = vsel %vm340, %v343, %v336
    %v345 = vsel %vm341, %v343, %v337
    %s346 = sld [smem:[#allocation2 + $0x24]]
    %v347 = vstv %s346
    %vm348 = vcmp.gt.f32.partialorder %v54, %v347
    %vm349 = vcmp.gt.f32.partialorder %v55, %v347
    %s350 = sld [smem:[#allocation6 + $0x25]]
    %v351 = vstv %s350
    %v352 = vsel %vm348, %v351, %v344
    %v353 = vsel %vm349, %v351, %v345
    %s354 = sld [smem:[#allocation2 + $0x25]]
    %v355 = vstv %s354
    %vm356 = vcmp.gt.f32.partialorder %v54, %v355
    %vm357 = vcmp.gt.f32.partialorder %v55, %v355
    %s358 = sld [smem:[#allocation6 + $0x26]]
    %v359 = vstv %s358
    %v360 = vsel %vm356, %v359, %v352
    %v361 = vsel %vm357, %v359, %v353
    %s362 = sld [smem:[#allocation2 + $0x26]]
    %v363 = vstv %s362
    %vm364 = vcmp.gt.f32.partialorder %v54, %v363
    %vm365 = vcmp.gt.f32.partialorder %v55, %v363
    %s366 = sld [smem:[#allocation6 + $0x27]]
    %v367 = vstv %s366
    %v368 = vsel %vm364, %v367, %v360
    %v369 = vsel %vm365, %v367, %v361
    %s370 = sld [smem:[#allocation2 + $0x27]]
    %v371 = vstv %s370
    %vm372 = vcmp.gt.f32.partialorder %v54, %v371
    %vm373 = vcmp.gt.f32.partialorder %v55, %v371
    %s374 = sld [smem:[#allocation6 + $0x28]]
    %v375 = vstv %s374
    %v376 = vsel %vm372, %v375, %v368
    %v377 = vsel %vm373, %v375, %v369
    %s378 = sld [smem:[#allocation2 + $0x28]]
    %v379 = vstv %s378
    %vm380 = vcmp.gt.f32.partialorder %v54, %v379
    %vm381 = vcmp.gt.f32.partialorder %v55, %v379
    %s382 = sld [smem:[#allocation6 + $0x29]]
    %v383 = vstv %s382
    %v384 = vsel %vm380, %v383, %v376
    %v385 = vsel %vm381, %v383, %v377
    %s386 = sld [smem:[#allocation2 + $0x29]]
    %v387 = vstv %s386
    %vm388 = vcmp.gt.f32.partialorder %v54, %v387
    %vm389 = vcmp.gt.f32.partialorder %v55, %v387
    %s390 = sld [smem:[#allocation6 + $0x2a]]
    %v391 = vstv %s390
    %v392 = vsel %vm388, %v391, %v384
    %v393 = vsel %vm389, %v391, %v385
    %s394 = sld [smem:[#allocation2 + $0x2a]]
    %v395 = vstv %s394
    %vm396 = vcmp.gt.f32.partialorder %v54, %v395
    %vm397 = vcmp.gt.f32.partialorder %v55, %v395
    %s398 = sld [smem:[#allocation6 + $0x2b]]
    %v399 = vstv %s398
    %v400 = vsel %vm396, %v399, %v392
    %v401 = vsel %vm397, %v399, %v393
    %s402 = sld [smem:[#allocation2 + $0x2b]]
    %v403 = vstv %s402
    %vm404 = vcmp.gt.f32.partialorder %v54, %v403
    %vm405 = vcmp.gt.f32.partialorder %v55, %v403
    %s406 = sld [smem:[#allocation6 + $0x2c]]
    %v407 = vstv %s406
    %v408 = vsel %vm404, %v407, %v400
    %v409 = vsel %vm405, %v407, %v401
    %s410 = sld [smem:[#allocation2 + $0x2c]]
    %v411 = vstv %s410
    %vm412 = vcmp.gt.f32.partialorder %v54, %v411
    %vm413 = vcmp.gt.f32.partialorder %v55, %v411
    %s414 = sld [smem:[#allocation6 + $0x2d]]
    %v415 = vstv %s414
    %v416 = vsel %vm412, %v415, %v408
    %v417 = vsel %vm413, %v415, %v409
    %s418 = sld [smem:[#allocation2 + $0x2d]]
    %v419 = vstv %s418
    %vm420 = vcmp.gt.f32.partialorder %v54, %v419
    %vm421 = vcmp.gt.f32.partialorder %v55, %v419
    %s422 = sld [smem:[#allocation6 + $0x2e]]
    %v423 = vstv %s422
    %v424 = vsel %vm420, %v423, %v416
    %v425 = vsel %vm421, %v423, %v417
    %s426 = sld [smem:[#allocation2 + $0x2e]]
    %v427 = vstv %s426
    %vm428 = vcmp.gt.f32.partialorder %v54, %v427
    %vm429 = vcmp.gt.f32.partialorder %v55, %v427
    %s430 = sld [smem:[#allocation6 + $0x2f]]
    %v431 = vstv %s430
    %v432 = vsel %vm428, %v431, %v424
    %v433 = vsel %vm429, %v431, %v425
    %s434 = sld [smem:[#allocation2 + $0x2f]]
    %v435 = vstv %s434
    %vm436 = vcmp.gt.f32.partialorder %v54, %v435
    %vm437 = vcmp.gt.f32.partialorder %v55, %v435
    %s438 = sld [smem:[#allocation6 + $0x30]]
    %v439 = vstv %s438
    %v440 = vsel %vm436, %v439, %v432
    %v441 = vsel %vm437, %v439, %v433
    %s442 = sld [smem:[#allocation2 + $0x30]]
    %v443 = vstv %s442
    %vm444 = vcmp.gt.f32.partialorder %v54, %v443
    %vm445 = vcmp.gt.f32.partialorder %v55, %v443
    %s446 = sld [smem:[#allocation6 + $0x31]]
    %v447 = vstv %s446
    %v448 = vsel %vm444, %v447, %v440
    %v449 = vsel %vm445, %v447, %v441
    %s450 = sld [smem:[#allocation2 + $0x31]]
    %v451 = vstv %s450
    %vm452 = vcmp.gt.f32.partialorder %v54, %v451
    %vm453 = vcmp.gt.f32.partialorder %v55, %v451
    %s454 = sld [smem:[#allocation6 + $0x32]]
    %v455 = vstv %s454
    %v456 = vsel %vm452, %v455, %v448
    %v457 = vsel %vm453, %v455, %v449
    %s458 = sld [smem:[#allocation2 + $0x32]]
    %v459 = vstv %s458
    %vm460 = vcmp.gt.f32.partialorder %v54, %v459
    %vm461 = vcmp.gt.f32.partialorder %v55, %v459
    %s462 = sld [smem:[#allocation6 + $0x33]]
    %v463 = vstv %s462
    %v464 = vsel %vm460, %v463, %v456
    %v465 = vsel %vm461, %v463, %v457
    %s466 = sld [smem:[#allocation2 + $0x33]]
    %v467 = vstv %s466
    %vm468 = vcmp.gt.f32.partialorder %v54, %v467
    %vm469 = vcmp.gt.f32.partialorder %v55, %v467
    %s470 = sld [smem:[#allocation6 + $0x34]]
    %v471 = vstv %s470
    %v472 = vsel %vm468, %v471, %v464
    %v473 = vsel %vm469, %v471, %v465
    %s474 = sld [smem:[#allocation2 + $0x34]]
    %v475 = vstv %s474
    %vm476 = vcmp.gt.f32.partialorder %v54, %v475
    %vm477 = vcmp.gt.f32.partialorder %v55, %v475
    %s478 = sld [smem:[#allocation6 + $0x35]]
    %v479 = vstv %s478
    %v480 = vsel %vm476, %v479, %v472
    %v481 = vsel %vm477, %v479, %v473
    %s482 = sld [smem:[#allocation2 + $0x35]]
    %v483 = vstv %s482
    %vm484 = vcmp.gt.f32.partialorder %v54, %v483
    %vm485 = vcmp.gt.f32.partialorder %v55, %v483
    %s486 = sld [smem:[#allocation6 + $0x36]]
    %v487 = vstv %s486
    %v488 = vsel %vm484, %v487, %v480
    %v489 = vsel %vm485, %v487, %v481
    %s490 = sld [smem:[#allocation2 + $0x36]]
    %v491 = vstv %s490
    %vm492 = vcmp.gt.f32.partialorder %v54, %v491
    %vm493 = vcmp.gt.f32.partialorder %v55, %v491
    %s494 = sld [smem:[#allocation6 + $0x37]]
    %v495 = vstv %s494
    %v496 = vsel %vm492, %v495, %v488
    %v497 = vsel %vm493, %v495, %v489
    %s498 = sld [smem:[#allocation2 + $0x37]]
    %v499 = vstv %s498
    %vm500 = vcmp.gt.f32.partialorder %v54, %v499
    %vm501 = vcmp.gt.f32.partialorder %v55, %v499
    %s502 = sld [smem:[#allocation6 + $0x38]]
    %v503 = vstv %s502
    %v504 = vsel %vm500, %v503, %v496
    %v505 = vsel %vm501, %v503, %v497
    %s506 = sld [smem:[#allocation2 + $0x38]]
    %v507 = vstv %s506
    %vm508 = vcmp.gt.f32.partialorder %v54, %v507
    %vm509 = vcmp.gt.f32.partialorder %v55, %v507
    %s510 = sld [smem:[#allocation6 + $0x39]]
    %v511 = vstv %s510
    %v512 = vsel %vm508, %v511, %v504
    %v513 = vsel %vm509, %v511, %v505
    %s514 = sld [smem:[#allocation2 + $0x39]]
    %v515 = vstv %s514
    %vm516 = vcmp.gt.f32.partialorder %v54, %v515
    %vm517 = vcmp.gt.f32.partialorder %v55, %v515
    %s518 = sld [smem:[#allocation6 + $0x3a]]
    %v519 = vstv %s518
    %v520 = vsel %vm516, %v519, %v512
    %v521 = vsel %vm517, %v519, %v513
    %s522 = sld [smem:[#allocation2 + $0x3a]]
    %v523 = vstv %s522
    %vm524 = vcmp.gt.f32.partialorder %v54, %v523
    %vm525 = vcmp.gt.f32.partialorder %v55, %v523
    %s526 = sld [smem:[#allocation6 + $0x3b]]
    %v527 = vstv %s526
    %v528 = vsel %vm524, %v527, %v520
    %v529 = vsel %vm525, %v527, %v521
    %s530 = sld [smem:[#allocation2 + $0x3b]]
    %v531 = vstv %s530
    %vm532 = vcmp.gt.f32.partialorder %v54, %v531
    %vm533 = vcmp.gt.f32.partialorder %v55, %v531
    %s534 = sld [smem:[#allocation6 + $0x3c]]
    %v535 = vstv %s534
    %v536 = vsel %vm532, %v535, %v528
    %v537 = vsel %vm533, %v535, %v529
    %s538 = sld [smem:[#allocation2 + $0x3c]]
    %v539 = vstv %s538
    %vm540 = vcmp.gt.f32.partialorder %v54, %v539
    %vm541 = vcmp.gt.f32.partialorder %v55, %v539
    %s542 = sld [smem:[#allocation6 + $0x3d]]
    %v543 = vstv %s542
    %v544 = vsel %vm540, %v543, %v536
    %v545 = vsel %vm541, %v543, %v537
    %s546 = sld [smem:[#allocation2 + $0x3d]]
    %v547 = vstv %s546
    %vm548 = vcmp.gt.f32.partialorder %v54, %v547
    %vm549 = vcmp.gt.f32.partialorder %v55, %v547
    %s550 = sld [smem:[#allocation6 + $0x3e]]
    %v551 = vstv %s550
    %v552 = vsel %vm548, %v551, %v544
    %v553 = vsel %vm549, %v551, %v545
    %s554 = sld [smem:[#allocation2 + $0x3e]]
    %v555 = vstv %s554
    %vm556 = vcmp.gt.f32.partialorder %v54, %v555
    %vm557 = vcmp.gt.f32.partialorder %v55, %v555
    %s558 = sld [smem:[#allocation6 + $0x3f]]
    %v559 = vstv %s558
    %v560 = vsel %vm556, %v559, %v552
    %v561 = vsel %vm557, %v559, %v553
    %562 = vst [vmem:[#allocation9] sm:$0xff] %v560
    %563 = vst [vmem:[#allocation9 + $0x8] sm:$0xff] %v561
    // Predicated region
    $region26: #{tpu_custom_call.1} parent=1 // pred_check
      _
    $region27: #{tpu_custom_call.1} parent=1 // pred_check_branch
      %565 = sbr.rel (0) target = $region29
    $region28: #{tpu_custom_call.1} parent=1 // pred_region
      %567 = vsyncadd [#allocation4], 0
      %s569 = sshll.u32 [#allocation9], 4
      %s570 = int_to_ptr.vmem [resolvable:$true] %s569
      %s571 = sshll.u32 %s3, 4
      %s572 = int_to_ptr.hbm [resolvable:$true] %s571
      %574 = dma.vmem_to_hbm [thread:$0]  %s570, 256, %s572, [#allocation4]
    $region29: #{tpu_custom_call.1} parent=1 // pred_fallthru
      _
    // Predicated region
    $region30: #{tpu_custom_call.1} parent=1 // pred_check
      _
    $region31: #{tpu_custom_call.1} parent=1 // pred_check_branch
      %576 = sbr.rel (0) target = $region33
    $region32: #{tpu_custom_call.1} parent=1 // pred_region
      %578 = dma.done [#allocation4], 256
    $region33: #{tpu_custom_call.1} parent=1 // pred_fallthru
      _
    %579 = vsyncpa [#allocation3], 1
    %580 = vsyncpa [#allocation4], 1
    %581 = vsyncpa [#allocation5], 1
    %582 = vsyncpa [#allocation7], 1

</llo_original>
